<compile_context>
chip_gen: v5e
topology: v5e:2x2
jax: 0.10.0
libtpu: 0.0.40
codegen_flags: <defaults>
</compile_context>

<pallas_src>
import jax
import jax.numpy as jnp
import numpy as np
from jax import lax
from jax.experimental import pallas as pl
from jax.experimental.pallas import tpu as pltpu


# ----------------------------------------------------------------------------
# helpers
# ----------------------------------------------------------------------------
def _round_up(x, m):
    return ((x + m - 1) // m) * m


def _vmem_capacity_bytes():
    try:
        return int(pltpu.get_tpu_info().vmem_capacity_bytes)
    except Exception:
        return 64 << 20  # v7x (smallest physical VMEM) as the conservative default


def _plan_pool_tiles(B, C, S, target_tile_bytes):
    """Pick (TB, TS) for the (TB, C, TS) f32 pooling block.

    Uses lane/sublane-PADDED sizes (C->8, S->128) so the real VMEM footprint is
    what we budget for.  Falls back to spatial tiling (with in-kernel
    accumulation) when a single (C, S) row exceeds the target.
    """
    c_pad = _round_up(C, 8)
    row_bytes = c_pad * _round_up(S, 128) * 4       # one padded (1, C, S) f32 row
    tb = target_tile_bytes // max(row_bytes, 1)
    if tb >= B:
        return B, S
    if tb >= 8:
        return (tb // 8) * 8, S                     # sublane-aligned output block
    # One row is bigger than the target: tile the spatial axis instead.
    TB = B if B < 8 else 8
    ts_lanes = max(1, target_tile_bytes // (TB * c_pad * 128 * 4))
    TS = min(S, ts_lanes * 128)
    return TB, TS


def _plan_loss_tiles(B, Cp, in_elem_bytes, budget, force_tq=None):
    """Pick the query-row tile TQ for the loss kernel.

    Returns (TQ, num_tiles, single_tile).  single_tile enables the 3-matmul
    (s_ji == s_ij^T) fast path.
    """
    if force_tq is not None:                        # testing hook
        tq = min(int(force_tq), B)
        if tq >= B:
            return B, 1, True
        tq = max(8, (tq // 8) * 8)
        return tq, pl.cdiv(B, tq), False

    keys_bytes = 4 * B * Cp * in_elem_bytes         # 2 key arrays x 2 pipeline bufs

    def est(tq):
        q_bytes = 4 * tq * Cp * in_elem_bytes       # 2 query arrays x 2 bufs
        sim_bytes = 4 * tq * B * 4                  # up to 4 (tq, B) f32 temporaries
        return keys_bytes + q_bytes + 3 * sim_bytes + (4 << 20)

    thr = int(budget * 0.75)
    if est(B) <= thr:
        return B, 1, True
    tq = 256                                        # MXU-aligned (256 on v6e/v7x, /128 on v5e)
    while tq > 8 and est(tq) > thr:
        tq //= 2
    return tq, pl.cdiv(B, tq), False


# ----------------------------------------------------------------------------
# Kernel 1: per-location L2 normalization along C + global mean pool over S,
#           followed by cosine (row) normalization of the pooled reps.
# HBM-bound on all generations -> only tiling / VMEM budget matter.
# ----------------------------------------------------------------------------
def _make_norm_pool_kernel(S, TS, needs_s_mask):
    inv_s = 1.0 / float(S)

    def kernel(xi_ref, xj_ref, zi_ref, zj_ref):
        s = pl.program_id(1)
        ns = pl.num_programs(1)

        def partial_pool(x):
            x = x.astype(jnp.float32)                            # (TB, C, TS)
            if needs_s_mask:                                     # ragged last S tile
                lane = lax.broadcasted_iota(jnp.int32, x.shape, 2)
                x = jnp.where(s * TS + lane < S, x, 0.0)
            ss = jnp.sum(x * x, axis=1, keepdims=True)           # (TB, 1, TS)
            # F.normalize eps (1e-12 on the norm) + mean, folded into one scale.
            inv = lax.rsqrt(jnp.maximum(ss, 1e-24)) * inv_s
            return jnp.sum(x * inv, axis=2)                      # (TB, C)

        ci = partial_pool(xi_ref[...])
        cj = partial_pool(xj_ref[...])

        @pl.when(s == 0)
        def _():
            zi_ref[...] = jnp.zeros_like(zi_ref)
            zj_ref[...] = jnp.zeros_like(zj_ref)

        zi_ref[...] += ci
        zj_ref[...] += cj

        @pl.when(s == ns - 1)
        def _():
            # cosine-similarity row normalization (eps 1e-8 on the norm)
            for ref in (zi_ref, zj_ref):
                v = ref[...]
                n2 = jnp.sum(v * v, axis=1, keepdims=True)
                ref[...] = v * lax.rsqrt(jnp.maximum(n2, 1e-16))

    return kernel


# ----------------------------------------------------------------------------
# Kernel 2: row-tiled NT-Xent loss.  Queries are a TQ-row tile of the z_i / z_j
# pairs, the full (B, C) key set stays resident, per-tile partial sums go out.
# ----------------------------------------------------------------------------
def _make_loss_kernel(B, TQ, temperature, single_tile, needs_row_mask):
    inv_t = float(1.0 / temperature)

    def kernel(qi_ref, qj_ref, ki_ref, kj_ref, o_ref):
        q0 = pl.program_id(0) * TQ

        qi = qi_ref[...]                                         # (TQ, Cp)
        qj = qj_ref[...]
        ki = ki_ref[...]                                         # (B, Cp)
        kj = kj_ref[...]

        # Positives from the SAME (possibly bf16) operands the MXU sees.
        qif = qi.astype(jnp.float32)
        qjf = qj.astype(jnp.float32)
        pos = jnp.sum(qif * qjf, axis=1, keepdims=True)          # (TQ, 1)

        dims = (((1,), (1,)), ((), ()))                          # contract feature dim
        sii = lax.dot_general(qi, ki, dims, preferred_element_type=jnp.float32)
        sij = lax.dot_general(qi, kj, dims, preferred_element_type=jnp.float32)
        sjj = lax.dot_general(qj, kj, dims, preferred_element_type=jnp.float32)

        # Remove the self-similarity exactly by masking the computed Gram
        # diagonal (cheap iota compare; no (2B,2B) mask, exact cancellation
        # even with bf16 MXU inputs).
        r_glob = lax.broadcasted_iota(jnp.int32, (TQ, B), 0) + q0
        c_glob = lax.broadcasted_iota(jnp.int32, (TQ, B), 1)
        offdiag = r_glob != c_glob

        e_ii = jnp.where(offdiag, jnp.exp(sii * inv_t), 0.0)
        e_ij = jnp.exp(sij * inv_t)
        e_jj = jnp.where(offdiag, jnp.exp(sjj * inv_t), 0.0)

        den_i = (jnp.sum(e_ii, axis=1, keepdims=True)
                 + jnp.sum(e_ij, axis=1, keepdims=True))         # (TQ, 1)

        if single_tile:
            # s_ji == s_ij^T when the tile covers all rows: the j-row sums of
            # exp(s_ji/t) are the column sums of e_ij -> skip the 4th matmul
            # and its exp entirely.  sjj is symmetric, so its column sums equal
            # its row sums.
            den_j_row = (jnp.sum(e_jj, axis=0, keepdims=True)
                         + jnp.sum(e_ij, axis=0, keepdims=True))  # (1, B)
            sum_log_i = jnp.sum(jnp.log(den_i), axis=(0, 1), keepdims=True)
            sum_log_j = jnp.sum(jnp.log(den_j_row), axis=(0, 1), keepdims=True)
            sum_pos = jnp.sum(pos, axis=(0, 1), keepdims=True)
        else:
            sji = lax.dot_general(qj, ki, dims, preferred_element_type=jnp.float32)
            den_j = (jnp.sum(e_jj, axis=1, keepdims=True)
                     + jnp.sum(jnp.exp(sji * inv_t), axis=1, keepdims=True))
            log_i = jnp.log(den_i)
            log_j = jnp.log(den_j)
            if needs_row_mask:                                   # ragged last tile
                ridx = lax.broadcasted_iota(jnp.int32, (TQ, 1), 0) + q0
                valid = ridx < B
                log_i = jnp.where(valid, log_i, 0.0)
                log_j = jnp.where(valid, log_j, 0.0)
                pos = jnp.where(valid, pos, 0.0)
            sum_log_i = jnp.sum(log_i, axis=(0, 1), keepdims=True)
            sum_log_j = jnp.sum(log_j, axis=(0, 1), keepdims=True)
            sum_pos = jnp.sum(pos, axis=(0, 1), keepdims=True)

        # sum over the tile of: log(den_i) + log(den_j) - 2 * pos / t
        partial = sum_log_i + sum_log_j - 2.0 * inv_t * sum_pos  # (1, 1)
        o_ref[...] = jnp.broadcast_to(partial, (1, 1, 128)).astype(jnp.float32)

    return kernel


# ----------------------------------------------------------------------------
# wrapper
# ----------------------------------------------------------------------------
def contrastive_loss(emb_i, emb_j, batch_size, temperature=0.5, *,
                     mxu_bf16=True, force_pool_ts=None, force_loss_tq=None):
    B, C, H, W = emb_i.shape
    assert batch_size == B
    S = H * W

    # Metadata-only reshapes (flatten contiguous H, W) — no HBM copy, no concat.
    xi = emb_i.reshape(B, C, S)
    xj = emb_j.reshape(B, C, S)

    cap = _vmem_capacity_bytes()
    budget = min(int(cap * 0.8), 112 << 20)

    # ---------------- kernel 1: normalize + pool (+ cosine normalize) --------
    target_tile = min(budget // 8, 8 << 20)          # gains beyond ~8 MiB are <2%
    TB, TS = _plan_pool_tiles(B, C, S, target_tile)
    if force_pool_ts is not None:                    # testing hook
        TS = min(S, int(force_pool_ts))
    needs_s_mask = (S % TS) != 0

    in_block_b = TB * _round_up(C, 8) * _round_up(TS, 128) * 4
    out_block_b = _round_up(TB, 8) * _round_up(C, 128) * 4
    est1 = 4 * in_block_b + 4 * out_block_b + 2 * in_block_b + (4 << 20)
    vmem1 = min(int(cap * 0.9), max(est1, 32 << 20))

    in_spec = pl.BlockSpec((TB, C, TS), lambda b, s: (b, 0, s))
    out_spec = pl.BlockSpec((TB, C), lambda b, s: (b, 0))

    zi, zj = pl.pallas_call(
        _make_norm_pool_kernel(S, TS, needs_s_mask),
        out_shape=(jax.ShapeDtypeStruct((B, C), jnp.float32),
                   jax.ShapeDtypeStruct((B, C), jnp.float32)),
        grid=(pl.cdiv(B, TB), pl.cdiv(S, TS)),
        in_specs=[in_spec, in_spec],
        out_specs=(out_spec, out_spec),
        compiler_params=pltpu.CompilerParams(
            dimension_semantics=("parallel", "arbitrary"),
            vmem_limit_bytes=vmem1),
    )(xi, xj)

    # ---------------- kernel 2: NT-Xent loss ---------------------------------
    if mxu_bf16:
        zi_in = zi.astype(jnp.bfloat16)
        zj_in = zj.astype(jnp.bfloat16)
        bpe = 2
    else:
        zi_in, zj_in = zi, zj
        bpe = 4

    # Zero-pad the contraction dim to a lane multiple (dot products unchanged).
    Cp = _round_up(C, 128)
    if Cp != C:
        pad = ((0, 0), (0, Cp - C))
        zi_in = jnp.pad(zi_in, pad)
        zj_in = jnp.pad(zj_in, pad)

    TQ, nq, single = _plan_loss_tiles(B, Cp, bpe, budget, force_tq=force_loss_tq)
    needs_row_mask = (not single) and (B % TQ != 0)

    keys_b = 4 * B * Cp * bpe
    q_b = 4 * TQ * Cp * bpe
    sims_b = (3 if single else 4) * TQ * B * 4
    est2 = keys_b + q_b + 3 * sims_b + (4 << 20)
    vmem2 = min(int(cap * 0.9), max(est2, 32 << 20))

    partial = pl.pallas_call(
        _make_loss_kernel(B, TQ, float(temperature), single, needs_row_mask),
        out_shape=jax.ShapeDtypeStruct((nq, 1, 128), jnp.float32),
        grid=(nq,),
        in_specs=[pl.BlockSpec((TQ, Cp), lambda t: (t, 0)),   # query tile of z_i
                  pl.BlockSpec((TQ, Cp), lambda t: (t, 0)),   # query tile of z_j
                  pl.BlockSpec((B, Cp), lambda t: (0, 0)),    # resident keys z_i
                  pl.BlockSpec((B, Cp), lambda t: (0, 0))],   # resident keys z_j
        out_specs=pl.BlockSpec((1, 1, 128), lambda t: (t, 0, 0)),
        compiler_params=pltpu.CompilerParams(
            dimension_semantics=("parallel",),
            vmem_limit_bytes=vmem2),
    )(zi_in, zj_in, zi_in, zj_in)

    # Tiny wrapper-side reduction over per-tile partial sums.
    return jnp.sum(partial[:, 0, 0]) / (2.0 * B)


# ----------------------------------------------------------------------------
# pure-JAX reference mirroring the PyTorch module
# ----------------------------------------------------------------------------
def _reference_loss(emb_i, emb_j, batch_size, temperature=0.5):
    B, C, H, W = emb_i.shape

    def norm_pool(e):
        n = jnp.maximum(jnp.sqrt(jnp.sum(e * e, axis=1, keepdims=True)), 1e-12)
        z = e / n
        return z.reshape(B, C, -1).mean(-1)

    reps = jnp.concatenate([norm_pool(emb_i), norm_pool(emb_j)], axis=0)
    norms = jnp.maximum(jnp.linalg.norm(reps, axis=1, keepdims=True), 1e-8)
    gram = jnp.matmul(reps, reps.T, precision=lax.Precision.HIGHEST)
    sim = gram / (norms * norms.T)
    n2 = 2 * B
    idx = jnp.arange(n2)
    pos = sim[idx, (idx + B) % n2]
    mask = 1.0 - jnp.eye(n2)
    denom = jnp.sum(mask * jnp.exp(sim / temperature), axis=1)
    lp = -jnp.log(jnp.exp(pos / temperature) / denom)
    return jnp.sum(lp) / (2 * B)


if __name__ == "__main__":
    key = jax.random.PRNGKey(0)
    k1, k2, k3, k4, k5, k6 = jax.random.split(key, 6)

    # Case 1: default shapes; single-tile loss path (3-matmul fast path).
    B, C, H, W = 2, 4, 16, 16
    emb_i = jax.random.normal(k1, (B, C, H, W), dtype=jnp.float32)
    emb_j = jax.random.normal(k2, (B, C, H, W), dtype=jnp.float32)
    ref = _reference_loss(emb_i, emb_j, B, 0.5)

    out_f32 = jax.block_until_ready(
        contrastive_loss(emb_i, emb_j, B, 0.5, mxu_bf16=False))
    np.testing.assert_allclose(np.asarray(out_f32), np.asarray(ref),
                               rtol=1e-5, atol=1e-5)

    out_bf16 = jax.block_until_ready(
        contrastive_loss(emb_i, emb_j, B, 0.5))          # default bf16 MXU inputs
    np.testing.assert_allclose(np.asarray(out_bf16), np.asarray(ref),
                               rtol=5e-2, atol=5e-2)

    # Case 2: row-tiled loss path with a ragged last query tile (B=12, TQ=8).
    B2, C2, H2, W2 = 12, 4, 4, 4
    e_i = jax.random.normal(k3, (B2, C2, H2, W2), dtype=jnp.float32)
    e_j = jax.random.normal(k4, (B2, C2, H2, W2), dtype=jnp.float32)
    ref2 = _reference_loss(e_i, e_j, B2, 0.5)
    out2 = jax.block_until_ready(
        contrastive_loss(e_i, e_j, B2, 0.5, mxu_bf16=False, force_loss_tq=8))
    np.testing.assert_allclose(np.asarray(out2), np.asarray(ref2),
                               rtol=1e-5, atol=1e-5)

    # Case 3: spatially-tiled pooling with a ragged S tile (S=324, TS=128).
    B3, C3, H3, W3 = 3, 5, 18, 18
    f_i = jax.random.normal(k5, (B3, C3, H3, W3), dtype=jnp.float32)
    f_j = jax.random.normal(k6, (B3, C3, H3, W3), dtype=jnp.float32)
    ref3 = _reference_loss(f_i, f_j, B3, 0.5)
    out3 = jax.block_until_ready(
        contrastive_loss(f_i, f_j, B3, 0.5, mxu_bf16=False, force_pool_ts=128))
    np.testing.assert_allclose(np.asarray(out3), np.asarray(ref3),
                               rtol=1e-5, atol=1e-5)

    print("KERNEL_OK")
</pallas_src>

<mosaic_0001>
module attributes {stable_mosaic.version = 11 : i64} {
  func.func @kernel(%arg0: i32, %arg1: i32, %arg2: memref<2x4x256xf32, #tpu.memory_space<vmem>>, %arg3: memref<2x4x256xf32, #tpu.memory_space<vmem>>, %arg4: memref<2x4xf32, #tpu.memory_space<vmem>>, %arg5: memref<2x4xf32, #tpu.memory_space<vmem>>) attributes {dimension_semantics = [#tpu.dimension_semantics<parallel>, #tpu.dimension_semantics<arbitrary>], iteration_bounds = array<i64: 1, 1>, scalar_prefetch = 0 : i64, scratch_operands = 0 : i64, tpu.core_type = #tpu.core_type<tc>, window_params = [{transform_indices = @transform_0, window_bounds = array<i64: 2, 4, 256>}, {transform_indices = @transform_1, window_bounds = array<i64: 2, 4, 256>}, {transform_indices = @transform_2, window_bounds = array<i64: 2, 4>}, {transform_indices = @transform_3, window_bounds = array<i64: 2, 4>}]} {
    %c0 = arith.constant 0 : index
    %c0_0 = arith.constant 0 : index
    %c0_1 = arith.constant 0 : index
    %0 = vector.load %arg2[%c0, %c0_0, %c0_1] : memref<2x4x256xf32, #tpu.memory_space<vmem>>, vector<2x4x256xf32>
    %1 = arith.mulf %0, %0 : vector<2x4x256xf32>
    %cst = arith.constant dense<0.000000e+00> : vector<2x256xf32>
    %2 = vector.multi_reduction <add>, %1, %cst [1] : vector<2x4x256xf32> to vector<2x256xf32>
    %3 = vector.shape_cast %2 : vector<2x256xf32> to vector<2x1x256xf32>
    %cst_2 = arith.constant 1.000000e-24 : f32
    %4 = vector.broadcast %cst_2 : f32 to vector<2x1x256xf32>
    %5 = arith.maximumf %3, %4 : vector<2x1x256xf32>
    %6 = math.rsqrt %5 : vector<2x1x256xf32>
    %cst_3 = arith.constant 3.906250e-03 : f32
    %7 = vector.broadcast %cst_3 : f32 to vector<2x1x256xf32>
    %8 = arith.mulf %6, %7 : vector<2x1x256xf32>
    %9 = vector.broadcast %8 : vector<2x1x256xf32> to vector<2x4x256xf32>
    %10 = arith.mulf %0, %9 : vector<2x4x256xf32>
    %cst_4 = arith.constant dense<0.000000e+00> : vector<2x4xf32>
    %11 = vector.multi_reduction <add>, %10, %cst_4 [2] : vector<2x4x256xf32> to vector<2x4xf32>
    %c0_5 = arith.constant 0 : index
    %c0_6 = arith.constant 0 : index
    %c0_7 = arith.constant 0 : index
    %12 = vector.load %arg3[%c0_5, %c0_6, %c0_7] : memref<2x4x256xf32, #tpu.memory_space<vmem>>, vector<2x4x256xf32>
    %13 = arith.mulf %12, %12 : vector<2x4x256xf32>
    %cst_8 = arith.constant dense<0.000000e+00> : vector<2x256xf32>
    %14 = vector.multi_reduction <add>, %13, %cst_8 [1] : vector<2x4x256xf32> to vector<2x256xf32>
    %15 = vector.shape_cast %14 : vector<2x256xf32> to vector<2x1x256xf32>
    %cst_9 = arith.constant 1.000000e-24 : f32
    %16 = vector.broadcast %cst_9 : f32 to vector<2x1x256xf32>
    %17 = arith.maximumf %15, %16 : vector<2x1x256xf32>
    %18 = math.rsqrt %17 : vector<2x1x256xf32>
    %cst_10 = arith.constant 3.906250e-03 : f32
    %19 = vector.broadcast %cst_10 : f32 to vector<2x1x256xf32>
    %20 = arith.mulf %18, %19 : vector<2x1x256xf32>
    %21 = vector.broadcast %20 : vector<2x1x256xf32> to vector<2x4x256xf32>
    %22 = arith.mulf %12, %21 : vector<2x4x256xf32>
    %cst_11 = arith.constant dense<0.000000e+00> : vector<2x4xf32>
    %23 = vector.multi_reduction <add>, %22, %cst_11 [2] : vector<2x4x256xf32> to vector<2x4xf32>
    %c0_i32 = arith.constant 0 : i32
    %24 = arith.cmpi eq, %arg1, %c0_i32 : i32
    %25 = arith.extui %24 : i1 to i32
    %c0_i32_12 = arith.constant 0 : i32
    %26 = arith.cmpi ne, %25, %c0_i32_12 : i32
    scf.if %26 {
      %cst_23 = arith.constant 0.000000e+00 : f32
      %36 = vector.broadcast %cst_23 : f32 to vector<2x4xf32>
      %c0_24 = arith.constant 0 : index
      %c0_25 = arith.constant 0 : index
      %37 = vector.load %arg4[%c0_24, %c0_25] : memref<2x4xf32, #tpu.memory_space<vmem>>, vector<2x4xf32>
      tpu.vector_store %arg4[%c0_24, %c0_25], %36 {strides = array<i32>} : memref<2x4xf32, #tpu.memory_space<vmem>>, vector<2x4xf32>,
      %cst_26 = arith.constant 0.000000e+00 : f32
      %38 = vector.broadcast %cst_26 : f32 to vector<2x4xf32>
      %c0_27 = arith.constant 0 : index
      %c0_28 = arith.constant 0 : index
      %39 = vector.load %arg5[%c0_27, %c0_28] : memref<2x4xf32, #tpu.memory_space<vmem>>, vector<2x4xf32>
      tpu.vector_store %arg5[%c0_27, %c0_28], %38 {strides = array<i32>} : memref<2x4xf32, #tpu.memory_space<vmem>>, vector<2x4xf32>,
    } else {
    }
    %c0_13 = arith.constant 0 : index
    %c0_14 = arith.constant 0 : index
    %27 = vector.load %arg4[%c0_13, %c0_14] : memref<2x4xf32, #tpu.memory_space<vmem>>, vector<2x4xf32>
    %28 = arith.addf %27, %11 : vector<2x4xf32>
    %c0_15 = arith.constant 0 : index
    %c0_16 = arith.constant 0 : index
    %29 = vector.load %arg4[%c0_15, %c0_16] : memref<2x4xf32, #tpu.memory_space<vmem>>, vector<2x4xf32>
    tpu.vector_store %arg4[%c0_15, %c0_16], %28 {strides = array<i32>} : memref<2x4xf32, #tpu.memory_space<vmem>>, vector<2x4xf32>,
    %c0_17 = arith.constant 0 : index
    %c0_18 = arith.constant 0 : index
    %30 = vector.load %arg5[%c0_17, %c0_18] : memref<2x4xf32, #tpu.memory_space<vmem>>, vector<2x4xf32>
    %31 = arith.addf %30, %23 : vector<2x4xf32>
    %c0_19 = arith.constant 0 : index
    %c0_20 = arith.constant 0 : index
    %32 = vector.load %arg5[%c0_19, %c0_20] : memref<2x4xf32, #tpu.memory_space<vmem>>, vector<2x4xf32>
    tpu.vector_store %arg5[%c0_19, %c0_20], %31 {strides = array<i32>} : memref<2x4xf32, #tpu.memory_space<vmem>>, vector<2x4xf32>,
    %c0_i32_21 = arith.constant 0 : i32
    %33 = arith.cmpi eq, %arg1, %c0_i32_21 : i32
    %34 = arith.extui %33 : i1 to i32
    %c0_i32_22 = arith.constant 0 : i32
    %35 = arith.cmpi ne, %34, %c0_i32_22 : i32
    scf.if %35 {
      %c0_23 = arith.constant 0 : index
      %c0_24 = arith.constant 0 : index
      %36 = vector.load %arg4[%c0_23, %c0_24] : memref<2x4xf32, #tpu.memory_space<vmem>>, vector<2x4xf32>
      %37 = arith.mulf %36, %36 : vector<2x4xf32>
      %cst_25 = arith.constant dense<0.000000e+00> : vector<2xf32>
      %38 = vector.multi_reduction <add>, %37, %cst_25 [1] : vector<2x4xf32> to vector<2xf32>
      %39 = vector.shape_cast %38 : vector<2xf32> to vector<2x1xf32>
      %cst_26 = arith.constant 1.000000e-16 : f32
      %40 = vector.broadcast %cst_26 : f32 to vector<2x1xf32>
      %41 = arith.maximumf %39, %40 : vector<2x1xf32>
      %42 = math.rsqrt %41 : vector<2x1xf32>
      %43 = vector.broadcast %42 : vector<2x1xf32> to vector<2x4xf32>
      %44 = arith.mulf %36, %43 : vector<2x4xf32>
      %c0_27 = arith.constant 0 : index
      %c0_28 = arith.constant 0 : index
      %45 = vector.load %arg4[%c0_27, %c0_28] : memref<2x4xf32, #tpu.memory_space<vmem>>, vector<2x4xf32>
      tpu.vector_store %arg4[%c0_27, %c0_28], %44 {strides = array<i32>} : memref<2x4xf32, #tpu.memory_space<vmem>>, vector<2x4xf32>,
      %c0_29 = arith.constant 0 : index
      %c0_30 = arith.constant 0 : index
      %46 = vector.load %arg5[%c0_29, %c0_30] : memref<2x4xf32, #tpu.memory_space<vmem>>, vector<2x4xf32>
      %47 = arith.mulf %46, %46 : vector<2x4xf32>
      %cst_31 = arith.constant dense<0.000000e+00> : vector<2xf32>
      %48 = vector.multi_reduction <add>, %47, %cst_31 [1] : vector<2x4xf32> to vector<2xf32>
      %49 = vector.shape_cast %48 : vector<2xf32> to vector<2x1xf32>
      %cst_32 = arith.constant 1.000000e-16 : f32
      %50 = vector.broadcast %cst_32 : f32 to vector<2x1xf32>
      %51 = arith.maximumf %49, %50 : vector<2x1xf32>
      %52 = math.rsqrt %51 : vector<2x1xf32>
      %53 = vector.broadcast %52 : vector<2x1xf32> to vector<2x4xf32>
      %54 = arith.mulf %46, %53 : vector<2x4xf32>
      %c0_33 = arith.constant 0 : index
      %c0_34 = arith.constant 0 : index
      %55 = vector.load %arg5[%c0_33, %c0_34] : memref<2x4xf32, #tpu.memory_space<vmem>>, vector<2x4xf32>
      tpu.vector_store %arg5[%c0_33, %c0_34], %54 {strides = array<i32>} : memref<2x4xf32, #tpu.memory_space<vmem>>, vector<2x4xf32>,
    } else {
    }
    return
  }
  func.func @transform_0(%arg0: i32, %arg1: i32) -> (i32, i32, i32) {
    %c0_i32 = arith.constant 0 : i32
    %c0_i32_0 = arith.constant 0 : i32
    return %arg0, %c0_i32, %arg1 : i32, i32, i32
  }
  func.func @transform_1(%arg0: i32, %arg1: i32) -> (i32, i32, i32) {
    %c0_i32 = arith.constant 0 : i32
    %c0_i32_0 = arith.constant 0 : i32
    return %arg0, %c0_i32, %arg1 : i32, i32, i32
  }
  func.func @transform_2(%arg0: i32, %arg1: i32) -> (i32, i32) {
    %c0_i32 = arith.constant 0 : i32
    %c0_i32_0 = arith.constant 0 : i32
    return %arg0, %c0_i32 : i32, i32
  }
  func.func @transform_3(%arg0: i32, %arg1: i32) -> (i32, i32) {
    %c0_i32 = arith.constant 0 : i32
    %c0_i32_0 = arith.constant 0 : i32
    return %arg0, %c0_i32 : i32, i32
  }
}

</mosaic_0001>

<llo_original>
// kernel: tpu_custom_call.1
$region0: #{tpu_custom_call.1}
  #allocation0 [shape = 'u32[]', space=smem, size = 0x4, offset = 0x4, fixed_abs, tag = 'smem constant byte address 0x4 - core index']
  #allocation1 [shape = 'u32[72,128]{1,0:T(1,128)}', space=vmem, size = 0x9000, scoped, tag = 'internal scratch']
  %s0 = inlined_call_operand.hbm [shape: f32[2,4,256], index: 0, kind: input, shape index: {}]
  %s1 = inlined_call_operand.hbm [shape: f32[2,4,256], index: 1, kind: input, shape index: {}]
  %s2 = inlined_call_operand.hbm [shape: f32[2,4], index: 2, kind: output, shape index: {0}]
  %s3 = inlined_call_operand.hbm [shape: f32[2,4], index: 3, kind: output, shape index: {1}]
  %4 = xla_tuple %s2, %s3
  %s5 = sld [smem:[#allocation0]]
  $region42: #{tpu_custom_call.1} parent=0
    _
  %s7 = ssub.s32 1, %s5
  %s8 = scalar_select 0, %s7, %s5
  $region1: #{tpu_custom_call.1} parent=0
    #allocation2 [shape = 'u8[8192]{0}', space=vmem, size = 0x2000, scoped, tag = 'input window, operand 0, single buffered']
    #allocation3 [shape = 's32[1]{0}', space=sflag, size = 0x4, scoped, tag = 'scoped memory for tpu_custom_call.1']
    #allocation4 [shape = 's32[1]{0}', space=sflag, size = 0x4, scoped, tag = 'scoped memory for tpu_custom_call.1']
    #allocation5 [shape = 'u8[8192]{0}', space=vmem, size = 0x2000, scoped, tag = 'input window, operand 1, single buffered']
    #allocation6 [shape = 's32[1]{0}', space=sflag, size = 0x4, scoped, tag = 'scoped memory for tpu_custom_call.1']
    #allocation7 [shape = 'u8[1024]{0}', space=vmem, size = 0x400, scoped, tag = 'output window, operand 0, single buffered']
    #allocation8 [shape = 'u8[1024]{0}', space=vmem, size = 0x400, scoped, tag = 'output window, operand 1, single buffered']
    #allocation9 [shape = 's32[1]{0}', space=sflag, size = 0x4, scoped, tag = 'scoped memory for tpu_custom_call.1']
    %9 = vsyncpa [#allocation3], 0
    %10 = vsyncpa [#allocation6], 0
    %11 = vsyncpa [#allocation4], 0
    %12 = vsyncpa [#allocation9], 0
    // Predicated region
    $region2: #{tpu_custom_call.1} parent=1 // pred_check
      _
    $region3: #{tpu_custom_call.1} parent=1 // pred_check_branch
      %14 = sbr.rel (0) target = $region5
    $region4: #{tpu_custom_call.1} parent=1 // pred_region
      %16 = vsyncadd [#allocation3], 0
      %s17 = sshll.u32 %s0, 4
      %s18 = int_to_ptr.hbm [resolvable:$true] %s17
      %s19 = sshll.u32 [#allocation2], 4
      %s20 = int_to_ptr.vmem [resolvable:$true] %s19
      %25 = dma.hbm_to_vmem [thread:$0]  %s18, 256, %s20, [#allocation3], 128, 128, 8
    $region5: #{tpu_custom_call.1} parent=1 // pred_fallthru
      _
    // Predicated region
    $region6: #{tpu_custom_call.1} parent=1 // pred_check
      _
    $region7: #{tpu_custom_call.1} parent=1 // pred_check_branch
      %27 = sbr.rel (0) target = $region9
    $region8: #{tpu_custom_call.1} parent=1 // pred_region
      %29 = vsyncadd [#allocation6], 0
      %s30 = sshll.u32 %s1, 4
      %s31 = int_to_ptr.hbm [resolvable:$true] %s30
      %s32 = sshll.u32 [#allocation5], 4
      %s33 = int_to_ptr.vmem [resolvable:$true] %s32
      %38 = dma.hbm_to_vmem [thread:$0]  %s31, 256, %s33, [#allocation6], 128, 128, 8
    $region9: #{tpu_custom_call.1} parent=1 // pred_fallthru
      _
    // Predicated region
    $region10: #{tpu_custom_call.1} parent=1 // pred_check
      _
    $region11: #{tpu_custom_call.1} parent=1 // pred_check_branch
      %40 = sbr.rel (0) target = $region13
    $region12: #{tpu_custom_call.1} parent=1 // pred_region
      %42 = dma.done [#allocation3], 256
    $region13: #{tpu_custom_call.1} parent=1 // pred_fallthru
      _
    // Predicated region
    $region14: #{tpu_custom_call.1} parent=1 // pred_check
      _
    $region15: #{tpu_custom_call.1} parent=1 // pred_check_branch
      %44 = sbr.rel (0) target = $region17
    $region16: #{tpu_custom_call.1} parent=1 // pred_region
      %46 = dma.done [#allocation6], 256
    $region17: #{tpu_custom_call.1} parent=1 // pred_fallthru
      _
    %v47 = vld [vmem:[#allocation2] sm:$0xff]
    %v48 = vld [vmem:[#allocation2 + $0x8] sm:$0xff]
    %v49 = vmul.f32 %v47, %v47
    %v50 = vmul.f32 %v48, %v48
    %53 = vst [vmem:[#allocation1] ss:$2 sm:$0xff] %v49
    %v54 = vld.sshfl [vmem:[#allocation1] sm:$0xff pattern:$0x75316420]
    %v55 = vld.sshfl [vmem:[#allocation1 + $0x8] sm:$0xff pattern:$0x75316420]
    %s56 = scalar_lea.vmem [#allocation1], 16
    %57 = vst [vmem:[%s56] ss:$2 sm:$0xff] %v50
    %v58 = vld.sshfl [vmem:[#allocation1 + $0x10] sm:$0xff pattern:$0x75316420]
    %v59 = vld.sshfl [vmem:[#allocation1 + $0x18] sm:$0xff pattern:$0x75316420]
    %vm64 = vcmask 1043456
    %v65 = vsel %vm64, %v54, 0.0
    %v66 = vrot.slane %v65, 4
    %v67 = vadd.f32 %v65, %v66
    %v68 = vrot.slane %v67, 2
    %v69 = vadd.f32 %v67, %v68
    %v70 = vrot.slane %v69, 1
    %v71 = vadd.f32 %v69, %v70
    %v72 = vsel %vm64, %v55, 0.0
    %v73 = vrot.slane %v72, 4
    %v74 = vadd.f32 %v72, %v73
    %v75 = vrot.slane %v74, 2
    %v76 = vadd.f32 %v74, %v75
    %v77 = vrot.slane %v76, 1
    %v78 = vadd.f32 %v76, %v77
    %v79 = vsel %vm64, %v58, 0.0
    %v80 = vrot.slane %v79, 4
    %v81 = vadd.f32 %v79, %v80
    %v82 = vrot.slane %v81, 2
    %v83 = vadd.f32 %v81, %v82
    %v84 = vrot.slane %v83, 1
    %v85 = vadd.f32 %v83, %v84
    %v86 = vsel %vm64, %v59, 0.0
    %v87 = vrot.slane %v86, 4
    %v88 = vadd.f32 %v86, %v87
    %v89 = vrot.slane %v88, 2
    %v90 = vadd.f32 %v88, %v89
    %v91 = vrot.slane %v90, 1
    %v92 = vadd.f32 %v90, %v91
    %v93 = vmax.f32 %v71, 1e-24
    %v94 = vmax.f32 %v78, 1e-24
    %v95 = vmax.f32 %v85, 1e-24
    %v96 = vmax.f32 %v92, 1e-24
    %v97 = vrsqrt.pop %v93
    %v98 = vmul.f32 %v97, %v93
    %v99 = vmul.f32 %v98, %v97
    %v100 = vmul.f32 0.5, %v99
    %v101 = vsub.f32 1.5, %v100
    %v102 = vmul.f32 %v97, %v101
    %vm103 = vweird.f32 %v93
    %vm104 = vweird.f32 %v97
    %vm105 = vmor %vm103, %vm104
    %v106 = vsel %vm105, %v97, %v102
    %v107 = vrsqrt.pop %v94
    %v108 = vmul.f32 %v107, %v94
    %v109 = vmul.f32 %v108, %v107
    %v110 = vmul.f32 0.5, %v109
    %v111 = vsub.f32 1.5, %v110
    %v112 = vmul.f32 %v107, %v111
    %vm113 = vweird.f32 %v94
    %vm114 = vweird.f32 %v107
    %vm115 = vmor %vm113, %vm114
    %v116 = vsel %vm115, %v107, %v112
    %v117 = vrsqrt.pop %v95
    %v118 = vmul.f32 %v117, %v95
    %v119 = vmul.f32 %v118, %v117
    %v120 = vmul.f32 0.5, %v119
    %v121 = vsub.f32 1.5, %v120
    %v122 = vmul.f32 %v117, %v121
    %vm123 = vweird.f32 %v95
    %vm124 = vweird.f32 %v117
    %vm125 = vmor %vm123, %vm124
    %v126 = vsel %vm125, %v117, %v122
    %v127 = vrsqrt.pop %v96
    %v128 = vmul.f32 %v127, %v96
    %v129 = vmul.f32 %v128, %v127
    %v130 = vmul.f32 0.5, %v129
    %v131 = vsub.f32 1.5, %v130
    %v132 = vmul.f32 %v127, %v131
    %vm133 = vweird.f32 %v96
    %vm134 = vweird.f32 %v127
    %vm135 = vmor %vm133, %vm134
    %v136 = vsel %vm135, %v127, %v132
    %v137 = vmul.f32 %v106, 0.00390625
    %v138 = vmul.f32 %v116, 0.00390625
    %v139 = vmul.f32 %v126, 0.00390625
    %v140 = vmul.f32 %v136, 0.00390625
    %v145 = vrot.slane %v138, 4
    %v146 = vrot.slane %v140, 4
    %v147 = vsel %vm64, %v137, %v145
    %v148 = vsel %vm64, %v139, %v146
    %v151 = vmul.f32 %v47, %v147
    %v152 = vmul.f32 %v48, %v148
    %155 = vst [vmem:[#allocation1] ss:$2 sm:$0xff] %v151
    %v156 = vld.sshfl [vmem:[#allocation1] sm:$0xff pattern:$0x75316420]
    %v157 = vld.sshfl [vmem:[#allocation1 + $0x8] sm:$0xff pattern:$0x75316420]
    %s158 = scalar_lea.vmem [#allocation1], 16
    %159 = vst [vmem:[%s158] ss:$2 sm:$0xff] %v152
    %v160 = vld.sshfl [vmem:[#allocation1 + $0x10] sm:$0xff pattern:$0x75316420]
    %v161 = vld.sshfl [vmem:[#allocation1 + $0x18] sm:$0xff pattern:$0x75316420]
    %v166 = vsel %vm64, %v156, 0.0
    %v167 = vsel %vm64, %v157, 0.0
    %v168 = vadd.f32 %v166, %v167
    %169 = vadd.xlane.f32.xlu0 %v168
    %v170 = vpop.xlane.xlu0 %169
    %v171 = vsel %vm64, %v160, 0.0
    %v172 = vsel %vm64, %v161, 0.0
    %v173 = vadd.f32 %v171, %v172
    %174 = vadd.xlane.f32.xlu0 %v173
    %v175 = vpop.xlane.xlu0 %174
    %v176 = vld [vmem:[#allocation5] sm:$0xff]
    %v177 = vld [vmem:[#allocation5 + $0x8] sm:$0xff]
    %v178 = vmul.f32 %v176, %v176
    %v179 = vmul.f32 %v177, %v177
    %182 = vst [vmem:[#allocation1] ss:$2 sm:$0xff] %v178
    %v183 = vld.sshfl [vmem:[#allocation1] sm:$0xff pattern:$0x75316420]
    %v184 = vld.sshfl [vmem:[#allocation1 + $0x8] sm:$0xff pattern:$0x75316420]
    %s185 = scalar_lea.vmem [#allocation1], 16
    %186 = vst [vmem:[%s185] ss:$2 sm:$0xff] %v179
    %v187 = vld.sshfl [vmem:[#allocation1 + $0x10] sm:$0xff pattern:$0x75316420]
    %v188 = vld.sshfl [vmem:[#allocation1 + $0x18] sm:$0xff pattern:$0x75316420]
    %v193 = vsel %vm64, %v183, 0.0
    %v194 = vrot.slane %v193, 4
    %v195 = vadd.f32 %v193, %v194
    %v196 = vrot.slane %v195, 2
    %v197 = vadd.f32 %v195, %v196
    %v198 = vrot.slane %v197, 1
    %v199 = vadd.f32 %v197, %v198
    %v200 = vsel %vm64, %v184, 0.0
    %v201 = vrot.slane %v200, 4
    %v202 = vadd.f32 %v200, %v201
    %v203 = vrot.slane %v202, 2
    %v204 = vadd.f32 %v202, %v203
    %v205 = vrot.slane %v204, 1
    %v206 = vadd.f32 %v204, %v205
    %v207 = vsel %vm64, %v187, 0.0
    %v208 = vrot.slane %v207, 4
    %v209 = vadd.f32 %v207, %v208
    %v210 = vrot.slane %v209, 2
    %v211 = vadd.f32 %v209, %v210
    %v212 = vrot.slane %v211, 1
    %v213 = vadd.f32 %v211, %v212
    %v214 = vsel %vm64, %v188, 0.0
    %v215 = vrot.slane %v214, 4
    %v216 = vadd.f32 %v214, %v215
    %v217 = vrot.slane %v216, 2
    %v218 = vadd.f32 %v216, %v217
    %v219 = vrot.slane %v218, 1
    %v220 = vadd.f32 %v218, %v219
    %v221 = vmax.f32 %v199, 1e-24
    %v222 = vmax.f32 %v206, 1e-24
    %v223 = vmax.f32 %v213, 1e-24
    %v224 = vmax.f32 %v220, 1e-24
    %v225 = vrsqrt.pop %v221
    %v226 = vmul.f32 %v225, %v221
    %v227 = vmul.f32 %v226, %v225
    %v228 = vmul.f32 0.5, %v227
    %v229 = vsub.f32 1.5, %v228
    %v230 = vmul.f32 %v225, %v229
    %vm231 = vweird.f32 %v221
    %vm232 = vweird.f32 %v225
    %vm233 = vmor %vm231, %vm232
    %v234 = vsel %vm233, %v225, %v230
    %v235 = vrsqrt.pop %v222
    %v236 = vmul.f32 %v235, %v222
    %v237 = vmul.f32 %v236, %v235
    %v238 = vmul.f32 0.5, %v237
    %v239 = vsub.f32 1.5, %v238
    %v240 = vmul.f32 %v235, %v239
    %vm241 = vweird.f32 %v222
    %vm242 = vweird.f32 %v235
    %vm243 = vmor %vm241, %vm242
    %v244 = vsel %vm243, %v235, %v240
    %v245 = vrsqrt.pop %v223
    %v246 = vmul.f32 %v245, %v223
    %v247 = vmul.f32 %v246, %v245
    %v248 = vmul.f32 0.5, %v247
    %v249 = vsub.f32 1.5, %v248
    %v250 = vmul.f32 %v245, %v249
    %vm251 = vweird.f32 %v223
    %vm252 = vweird.f32 %v245
    %vm253 = vmor %vm251, %vm252
    %v254 = vsel %vm253, %v245, %v250
    %v255 = vrsqrt.pop %v224
    %v256 = vmul.f32 %v255, %v224
    %v257 = vmul.f32 %v256, %v255
    %v258 = vmul.f32 0.5, %v257
    %v259 = vsub.f32 1.5, %v258
    %v260 = vmul.f32 %v255, %v259
    %vm261 = vweird.f32 %v224
    %vm262 = vweird.f32 %v255
    %vm263 = vmor %vm261, %vm262
    %v264 = vsel %vm263, %v255, %v260
    %v265 = vmul.f32 %v234, 0.00390625
    %v266 = vmul.f32 %v244, 0.00390625
    %v267 = vmul.f32 %v254, 0.00390625
    %v268 = vmul.f32 %v264, 0.00390625
    %v273 = vrot.slane %v266, 4
    %v274 = vrot.slane %v268, 4
    %v275 = vsel %vm64, %v265, %v273
    %v276 = vsel %vm64, %v267, %v274
    %v279 = vmul.f32 %v176, %v275
    %v280 = vmul.f32 %v177, %v276
    %283 = vst [vmem:[#allocation1] ss:$2 sm:$0xff] %v279
    %v284 = vld.sshfl [vmem:[#allocation1] sm:$0xff pattern:$0x75316420]
    %v285 = vld.sshfl [vmem:[#allocation1 + $0x8] sm:$0xff pattern:$0x75316420]
    %s286 = scalar_lea.vmem [#allocation1], 16
    %287 = vst [vmem:[%s286] ss:$2 sm:$0xff] %v280
    %v288 = vld.sshfl [vmem:[#allocation1 + $0x10] sm:$0xff pattern:$0x75316420]
    %v289 = vld.sshfl [vmem:[#allocation1 + $0x18] sm:$0xff pattern:$0x75316420]
    %v294 = vsel %vm64, %v284, 0.0
    %v295 = vsel %vm64, %v285, 0.0
    %v296 = vadd.f32 %v294, %v295
    %297 = vadd.xlane.f32.xlu0 %v296
    %v298 = vpop.xlane.xlu0 %297
    %v299 = vsel %vm64, %v288, 0.0
    %v300 = vsel %vm64, %v289, 0.0
    %v301 = vadd.f32 %v299, %v300
    %302 = vadd.xlane.f32.xlu0 %v301
    %v303 = vpop.xlane.xlu0 %302
    %p304 = scmp.eq.s32.totalorder 0, 0
    // Predicated region
    $region18: #{tpu_custom_call.1} parent=1 // pred_check
      %p305 = pneg %p304
    $region19: #{tpu_custom_call.1} parent=1 // pred_check_branch
      %307 = sbr.rel (%p305) target = $region21
    $region20: #{tpu_custom_call.1} parent=1 // pred_region
      %vm308 = vcmask 25600
      %309 = vst.msk [vmem:[#allocation7] sm:$0x3] %vm308, 0.0
      %310 = vst.msk [vmem:[#allocation8] sm:$0x3] %vm308, 0.0
    $region21: #{tpu_custom_call.1} parent=1 // pred_fallthru
      _
    %v311 = vld [vmem:[#allocation7] sm:$0x3]
    %v314 = vlaneseq
    %v315 = vand.u32 %v314, 127
    %v316 = vperm.slane %v170, %v315
    %v317 = vperm.slane %v175, %v315
    %vm318 = vcmask 1041409
    %v319 = vsel %vm318, %v317, %v316
    %v321 = vadd.f32 %v311, %v319
    %vm322 = vcmask 25600
    %323 = vst.msk [vmem:[#allocation7] sm:$0x3] %vm322, %v321
    %v324 = vld [vmem:[#allocation8] sm:$0x3]
    %v327 = vperm.slane %v298, %v315
    %v328 = vperm.slane %v303, %v315
    %v329 = vsel %vm318, %v328, %v327
    %v331 = vadd.f32 %v324, %v329
    %332 = vst.msk [vmem:[#allocation8] sm:$0x3] %vm322, %v331
    // Predicated region
    $region22: #{tpu_custom_call.1} parent=1 // pred_check
      %p333 = pneg %p304
    $region23: #{tpu_custom_call.1} parent=1 // pred_check_branch
      %335 = sbr.rel (%p333) target = $region25
    $region24: #{tpu_custom_call.1} parent=1 // pred_region
      %v336 = vld [vmem:[#allocation7] sm:$0x3]
      %v337 = vmul.f32 %v336, %v336
      %v338 = vsel %vm322, %v337, 0.0
      %339 = vadd.xlane.f32.xlu0 %v338
      %v340 = vpop.xlane.xlu0 %339
      %v341 = vmax.f32 %v340, 1e-16
      %v342 = vrsqrt.pop %v341
      %v343 = vmul.f32 %v342, %v341
      %v344 = vmul.f32 %v343, %v342
      %v345 = vmul.f32 0.5, %v344
      %v346 = vsub.f32 1.5, %v345
      %v347 = vmul.f32 %v342, %v346
      %vm348 = vweird.f32 %v341
      %vm349 = vweird.f32 %v342
      %vm350 = vmor %vm348, %vm349
      %v351 = vsel %vm350, %v342, %v347
      %v352 = vmul.f32 %v336, %v351
      %353 = vst.msk [vmem:[#allocation7] sm:$0x3] %vm322, %v352
      %v354 = vld [vmem:[#allocation8] sm:$0x3]
      %v355 = vmul.f32 %v354, %v354
      %v356 = vsel %vm322, %v355, 0.0
      %357 = vadd.xlane.f32.xlu0 %v356
      %v358 = vpop.xlane.xlu0 %357
      %v359 = vmax.f32 %v358, 1e-16
      %v360 = vrsqrt.pop %v359
      %v361 = vmul.f32 %v360, %v359
      %v362 = vmul.f32 %v361, %v360
      %v363 = vmul.f32 0.5, %v362
      %v364 = vsub.f32 1.5, %v363
      %v365 = vmul.f32 %v360, %v364
      %vm366 = vweird.f32 %v359
      %vm367 = vweird.f32 %v360
      %vm368 = vmor %vm366, %vm367
      %v369 = vsel %vm368, %v360, %v365
      %v370 = vmul.f32 %v354, %v369
      %371 = vst.msk [vmem:[#allocation8] sm:$0x3] %vm322, %v370
    $region25: #{tpu_custom_call.1} parent=1 // pred_fallthru
      _
    // Predicated region
    $region26: #{tpu_custom_call.1} parent=1 // pred_check
      _
    $region27: #{tpu_custom_call.1} parent=1 // pred_check_branch
      %373 = sbr.rel (0) target = $region29
    $region28: #{tpu_custom_call.1} parent=1 // pred_region
      %375 = vsyncadd [#allocation4], 0
      %s377 = sshll.u32 [#allocation7], 4
      %s378 = int_to_ptr.vmem [resolvable:$true] %s377
      %s379 = sshll.u32 %s2, 4
      %s380 = int_to_ptr.hbm [resolvable:$true] %s379
      %382 = dma.vmem_to_hbm [thread:$0]  %s378, 32, %s380, [#allocation4]
    $region29: #{tpu_custom_call.1} parent=1 // pred_fallthru
      _
    // Predicated region
    $region30: #{tpu_custom_call.1} parent=1 // pred_check
      _
    $region31: #{tpu_custom_call.1} parent=1 // pred_check_branch
      %384 = sbr.rel (0) target = $region33
    $region32: #{tpu_custom_call.1} parent=1 // pred_region
      %386 = vsyncadd [#allocation9], 0
      %s388 = sshll.u32 [#allocation8], 4
      %s389 = int_to_ptr.vmem [resolvable:$true] %s388
      %s390 = sshll.u32 %s3, 4
      %s391 = int_to_ptr.hbm [resolvable:$true] %s390
      %393 = dma.vmem_to_hbm [thread:$0]  %s389, 32, %s391, [#allocation9]
    $region33: #{tpu_custom_call.1} parent=1 // pred_fallthru
      _
    // Predicated region
    $region34: #{tpu_custom_call.1} parent=1 // pred_check
      _
    $region35: #{tpu_custom_call.1} parent=1 // pred_check_branch
      %395 = sbr.rel (0) target = $region37
    $region36: #{tpu_custom_call.1} parent=1 // pred_region
      %397 = dma.done [#allocation4], 32
    $region37: #{tpu_custom_call.1} parent=1 // pred_fallthru
      _
    // Predicated region
    $region38: #{tpu_custom_call.1} parent=1 // pred_check
      _
    $region39: #{tpu_custom_call.1} parent=1 // pred_check_branch
      %399 = sbr.rel (0) target = $region41
    $region40: #{tpu_custom_call.1} parent=1 // pred_region
      %401 = dma.done [#allocation9], 32
    $region41: #{tpu_custom_call.1} parent=1 // pred_fallthru
      _
    %402 = vsyncpa [#allocation3], 1
    %403 = vsyncpa [#allocation6], 1
    %404 = vsyncpa [#allocation4], 1
    %405 = vsyncpa [#allocation9], 1

</llo_original>
